<compile_context>
chip_gen: v6e
topology: v6e:2x2x1
jax: 0.10.0
libtpu: 0.0.40
codegen_flags: <defaults>
</compile_context>

<pallas_src>
import jax
import jax.numpy as jnp
from jax.experimental import pallas as pl
from jax.experimental.pallas import tpu as pltpu


def _round_up(x, m):
    return ((x + m - 1) // m) * m


def deepsets_kernel(x_ref, w1_ref, b1_ref, w2_ref, b2_ref,
                    w3_ref, b3_ref, w4_ref, b4_ref, out_ref):
    TB, S, D = x_ref.shape                      # static block shape

    # Flatten the (TB, S) leading dims so phi's first matmul sees TB*S rows.
    x = x_ref[...].reshape(TB * S, D)

    # phi layer 1: Linear + ReLU on all TB*S particles at once (MXU, f32 acc).
    h = jnp.dot(x, w1_ref[...], preferred_element_type=jnp.float32) + b1_ref[...]
    h = jnp.maximum(h, 0.0)                     # (TB*S, H), f32

    # Aggregator (sum over the set) commutes with the linear phi layer 2:
    #   sum_s (h_s @ w2 + b2) == (sum_s h_s) @ w2 + S * b2
    h_sum = jnp.sum(h.reshape(TB, S, -1), axis=1)            # (TB, H), f32
    agg = (jnp.dot(h_sum.astype(w2_ref.dtype), w2_ref[...],
                   preferred_element_type=jnp.float32)
           + float(S) * b2_ref[...])                         # (TB, H), f32

    # rho MLP on the whole (TB, H) slab.
    r = (jnp.dot(agg.astype(w3_ref.dtype), w3_ref[...],
                 preferred_element_type=jnp.float32) + b3_ref[...])
    r = jnp.maximum(r, 0.0)
    o = (jnp.dot(r.astype(w4_ref.dtype), w4_ref[...],
                 preferred_element_type=jnp.float32) + b4_ref[...])   # (TB, O)

    out_ref[...] = o.astype(out_ref.dtype)


def deepsets_invariant_batch(x, params, *, tb=64, use_bf16=False):
    """x: (B, S, D) float32. Returns (B, O) float32.

    tb: number of batch elements (sets) processed per grid step.
    use_bf16: cast x and the weight matrices to bf16 (f32 accumulation) to
              halve HBM traffic; biases stay f32 and are added post-matmul.
    """
    w1, b1, w2, b2, w3, b3, w4, b4 = params
    B, S, D = x.shape
    O = w4.shape[1]

    # Batch-tile: multiple of 8 (sublane-dense output), no larger than needed.
    tb = max(8, _round_up(min(tb, _round_up(B, 8)), 8))
    B_pad = _round_up(B, tb)
    if B_pad != B:
        x = jnp.pad(x, ((0, B_pad - B), (0, 0), (0, 0)))

    compute_dtype = jnp.bfloat16 if use_bf16 else x.dtype
    xc = x.astype(compute_dtype)
    w1c, w2c, w3c, w4c = (w.astype(compute_dtype) for w in (w1, w2, w3, w4))

    grid = (B_pad // tb,)

    def resident(a):
        # Constant index_map -> block stays resident in VMEM across the grid.
        return pl.BlockSpec(a.shape, lambda i: (0,) * a.ndim)

    out = pl.pallas_call(
        deepsets_kernel,
        out_shape=jax.ShapeDtypeStruct((B_pad, O), jnp.float32),
        grid=grid,
        in_specs=[
            pl.BlockSpec((tb, S, D), lambda i: (i, 0, 0)),   # x: TB sets/step
            resident(w1c), resident(b1),
            resident(w2c), resident(b2),
            resident(w3c), resident(b3),
            resident(w4c), resident(b4),
        ],
        out_specs=pl.BlockSpec((tb, O), lambda i: (i, 0)),
        compiler_params=pltpu.CompilerParams(
            dimension_semantics=("parallel",)),
    )(xc, w1c, b1, w2c, b2, w3c, b3, w4c, b4)

    return out[:B]


def reference(x, params):
    """Pure-JAX reference mirroring the PyTorch forward (f32)."""
    w1, b1, w2, b2, w3, b3, w4, b4 = params
    agg_list = []
    for b in range(x.shape[0]):
        inp = x[b]                                        # (S, D)
        h = jnp.maximum(inp @ w1 + b1, 0.0)
        e = h @ w2 + b2                                   # phi(input)
        agg = jnp.sum(e, axis=0, keepdims=True)           # default_aggregator
        agg_list.append(agg)
    agg = jnp.stack(agg_list, axis=0)[:, 0, :]            # stack + squeeze(1)
    r = jnp.maximum(agg @ w3 + b3, 0.0)
    return r @ w4 + b4                                    # rho(agg)


if __name__ == "__main__":
    B, S, D, H, O = 2, 8, 16, 32, 8

    key = jax.random.PRNGKey(0)
    ks = jax.random.split(key, 9)
    x = jax.random.normal(ks[0], (B, S, D), dtype=jnp.float32)

    # Deterministic parameter init, biases kept 2D for TPU layout.
    w1 = jax.random.normal(ks[1], (D, H), dtype=jnp.float32) * (1.0 / jnp.sqrt(D))
    b1 = jax.random.normal(ks[2], (1, H), dtype=jnp.float32) * 0.01
    w2 = jax.random.normal(ks[3], (H, H), dtype=jnp.float32) * (1.0 / jnp.sqrt(H))
    b2 = jax.random.normal(ks[4], (1, H), dtype=jnp.float32) * 0.01
    w3 = jax.random.normal(ks[5], (H, H), dtype=jnp.float32) * (1.0 / jnp.sqrt(H))
    b3 = jax.random.normal(ks[6], (1, H), dtype=jnp.float32) * 0.01
    w4 = jax.random.normal(ks[7], (H, O), dtype=jnp.float32) * (1.0 / jnp.sqrt(H))
    b4 = jax.random.normal(ks[8], (1, O), dtype=jnp.float32) * 0.01
    params = (w1, b1, w2, b2, w3, b3, w4, b4)

    ref = reference(x, params)

    # f32 path: tight check against the reference.
    out = deepsets_invariant_batch(x, params, tb=64, use_bf16=False)
    out = jax.block_until_ready(out)
    assert out.shape == (B, O)
    assert jnp.allclose(out, ref, atol=1e-4, rtol=1e-4), "f32 mismatch vs reference"

    # bf16-fed path (f32 accumulation): loose check, just numerics of the cast.
    out_bf16 = deepsets_invariant_batch(x, params, tb=64, use_bf16=True)
    out_bf16 = jax.block_until_ready(out_bf16)
    assert out_bf16.shape == (B, O)
    assert jnp.allclose(out_bf16, ref, atol=2e-1, rtol=1e-1), "bf16 mismatch vs reference"

    print("KERNEL_OK")
</pallas_src>

<mosaic_0001>
module attributes {stable_mosaic.version = 11 : i64} {
  func.func @deepsets_kernel(%arg0: i32, %arg1: memref<8x8x16xf32, #tpu.memory_space<vmem>>, %arg2: memref<16x32xf32, #tpu.memory_space<vmem>>, %arg3: memref<1x32xf32, #tpu.memory_space<vmem>>, %arg4: memref<32x32xf32, #tpu.memory_space<vmem>>, %arg5: memref<1x32xf32, #tpu.memory_space<vmem>>, %arg6: memref<32x32xf32, #tpu.memory_space<vmem>>, %arg7: memref<1x32xf32, #tpu.memory_space<vmem>>, %arg8: memref<32x8xf32, #tpu.memory_space<vmem>>, %arg9: memref<1x8xf32, #tpu.memory_space<vmem>>, %arg10: memref<8x8xf32, #tpu.memory_space<vmem>>) attributes {dimension_semantics = [#tpu.dimension_semantics<parallel>], iteration_bounds = array<i64: 1>, scalar_prefetch = 0 : i64, scratch_operands = 0 : i64, tpu.core_type = #tpu.core_type<tc>, window_params = [{transform_indices = @transform_0, window_bounds = array<i64: 8, 8, 16>}, {pipeline_mode = #tpu.pipeline_mode<synchronous>, transform_indices = @transform_1, window_bounds = array<i64: 16, 32>}, {pipeline_mode = #tpu.pipeline_mode<synchronous>, transform_indices = @transform_2, window_bounds = array<i64: 1, 32>}, {pipeline_mode = #tpu.pipeline_mode<synchronous>, transform_indices = @transform_3, window_bounds = array<i64: 32, 32>}, {pipeline_mode = #tpu.pipeline_mode<synchronous>, transform_indices = @transform_4, window_bounds = array<i64: 1, 32>}, {pipeline_mode = #tpu.pipeline_mode<synchronous>, transform_indices = @transform_5, window_bounds = array<i64: 32, 32>}, {pipeline_mode = #tpu.pipeline_mode<synchronous>, transform_indices = @transform_6, window_bounds = array<i64: 1, 32>}, {pipeline_mode = #tpu.pipeline_mode<synchronous>, transform_indices = @transform_7, window_bounds = array<i64: 32, 8>}, {pipeline_mode = #tpu.pipeline_mode<synchronous>, transform_indices = @transform_8, window_bounds = array<i64: 1, 8>}, {transform_indices = @transform_9, window_bounds = array<i64: 8, 8>}]} {
    %c0 = arith.constant 0 : index
    %c0_0 = arith.constant 0 : index
    %c0_1 = arith.constant 0 : index
    %0 = vector.load %arg1[%c0, %c0_0, %c0_1] : memref<8x8x16xf32, #tpu.memory_space<vmem>>, vector<8x8x16xf32>
    %1 = vector.shape_cast %0 : vector<8x8x16xf32> to vector<64x16xf32>
    %c0_2 = arith.constant 0 : index
    %c0_3 = arith.constant 0 : index
    %2 = vector.load %arg2[%c0_2, %c0_3] : memref<16x32xf32, #tpu.memory_space<vmem>>, vector<16x32xf32>
    %cst = arith.constant dense<0.000000e+00> : vector<64x32xf32>
    %3 = tpu.matmul %1, %2, %cst {dimension_numbers = #tpu.dot_dimension_numbers<[1], [0], [0], [1], [0, 0, 1, 1], [], []>} : vector<64x16xf32>, vector<16x32xf32>, vector<64x32xf32> -> vector<64x32xf32>
    %c0_4 = arith.constant 0 : index
    %c0_5 = arith.constant 0 : index
    %4 = vector.load %arg3[%c0_4, %c0_5] : memref<1x32xf32, #tpu.memory_space<vmem>>, vector<1x32xf32>
    %5 = vector.broadcast %4 : vector<1x32xf32> to vector<64x32xf32>
    %6 = arith.addf %3, %5 : vector<64x32xf32>
    %cst_6 = arith.constant 0.000000e+00 : f32
    %7 = vector.broadcast %cst_6 : f32 to vector<64x32xf32>
    %8 = arith.maximumf %6, %7 : vector<64x32xf32>
    %9 = vector.shape_cast %8 : vector<64x32xf32> to vector<8x8x32xf32>
    %cst_7 = arith.constant dense<0.000000e+00> : vector<8x32xf32>
    %10 = vector.multi_reduction <add>, %9, %cst_7 [1] : vector<8x8x32xf32> to vector<8x32xf32>
    %c0_8 = arith.constant 0 : index
    %c0_9 = arith.constant 0 : index
    %11 = vector.load %arg4[%c0_8, %c0_9] : memref<32x32xf32, #tpu.memory_space<vmem>>, vector<32x32xf32>
    %cst_10 = arith.constant dense<0.000000e+00> : vector<8x32xf32>
    %12 = tpu.matmul %10, %11, %cst_10 {dimension_numbers = #tpu.dot_dimension_numbers<[1], [0], [0], [1], [0, 0, 1, 1], [], []>} : vector<8x32xf32>, vector<32x32xf32>, vector<8x32xf32> -> vector<8x32xf32>
    %c0_11 = arith.constant 0 : index
    %c0_12 = arith.constant 0 : index
    %13 = vector.load %arg5[%c0_11, %c0_12] : memref<1x32xf32, #tpu.memory_space<vmem>>, vector<1x32xf32>
    %cst_13 = arith.constant 8.000000e+00 : f32
    %14 = vector.broadcast %cst_13 : f32 to vector<1x32xf32>
    %15 = arith.mulf %14, %13 : vector<1x32xf32>
    %16 = vector.broadcast %15 : vector<1x32xf32> to vector<8x32xf32>
    %17 = arith.addf %12, %16 : vector<8x32xf32>
    %c0_14 = arith.constant 0 : index
    %c0_15 = arith.constant 0 : index
    %18 = vector.load %arg6[%c0_14, %c0_15] : memref<32x32xf32, #tpu.memory_space<vmem>>, vector<32x32xf32>
    %cst_16 = arith.constant dense<0.000000e+00> : vector<8x32xf32>
    %19 = tpu.matmul %17, %18, %cst_16 {dimension_numbers = #tpu.dot_dimension_numbers<[1], [0], [0], [1], [0, 0, 1, 1], [], []>} : vector<8x32xf32>, vector<32x32xf32>, vector<8x32xf32> -> vector<8x32xf32>
    %c0_17 = arith.constant 0 : index
    %c0_18 = arith.constant 0 : index
    %20 = vector.load %arg7[%c0_17, %c0_18] : memref<1x32xf32, #tpu.memory_space<vmem>>, vector<1x32xf32>
    %21 = vector.broadcast %20 : vector<1x32xf32> to vector<8x32xf32>
    %22 = arith.addf %19, %21 : vector<8x32xf32>
    %cst_19 = arith.constant 0.000000e+00 : f32
    %23 = vector.broadcast %cst_19 : f32 to vector<8x32xf32>
    %24 = arith.maximumf %22, %23 : vector<8x32xf32>
    %c0_20 = arith.constant 0 : index
    %c0_21 = arith.constant 0 : index
    %25 = vector.load %arg8[%c0_20, %c0_21] : memref<32x8xf32, #tpu.memory_space<vmem>>, vector<32x8xf32>
    %cst_22 = arith.constant dense<0.000000e+00> : vector<8x8xf32>
    %26 = tpu.matmul %24, %25, %cst_22 {dimension_numbers = #tpu.dot_dimension_numbers<[1], [0], [0], [1], [0, 0, 1, 1], [], []>} : vector<8x32xf32>, vector<32x8xf32>, vector<8x8xf32> -> vector<8x8xf32>
    %c0_23 = arith.constant 0 : index
    %c0_24 = arith.constant 0 : index
    %27 = vector.load %arg9[%c0_23, %c0_24] : memref<1x8xf32, #tpu.memory_space<vmem>>, vector<1x8xf32>
    %28 = vector.broadcast %27 : vector<1x8xf32> to vector<8x8xf32>
    %29 = arith.addf %26, %28 : vector<8x8xf32>
    %c0_25 = arith.constant 0 : index
    %c0_26 = arith.constant 0 : index
    %30 = vector.load %arg10[%c0_25, %c0_26] : memref<8x8xf32, #tpu.memory_space<vmem>>, vector<8x8xf32>
    tpu.vector_store %arg10[%c0_25, %c0_26], %29 {strides = array<i32>} : memref<8x8xf32, #tpu.memory_space<vmem>>, vector<8x8xf32>,
    return
  }
  func.func @transform_0(%arg0: i32) -> (i32, i32, i32) {
    %c0_i32 = arith.constant 0 : i32
    %c0_i32_0 = arith.constant 0 : i32
    %c0_i32_1 = arith.constant 0 : i32
    return %arg0, %c0_i32, %c0_i32_0 : i32, i32, i32
  }
  func.func @transform_1(%arg0: i32) -> (i32, i32) {
    %c0_i32 = arith.constant 0 : i32
    %c0_i32_0 = arith.constant 0 : i32
    %c0_i32_1 = arith.constant 0 : i32
    return %c0_i32, %c0_i32_0 : i32, i32
  }
  func.func @transform_2(%arg0: i32) -> (i32, i32) {
    %c0_i32 = arith.constant 0 : i32
    %c0_i32_0 = arith.constant 0 : i32
    %c0_i32_1 = arith.constant 0 : i32
    return %c0_i32, %c0_i32_0 : i32, i32
  }
  func.func @transform_3(%arg0: i32) -> (i32, i32) {
    %c0_i32 = arith.constant 0 : i32
    %c0_i32_0 = arith.constant 0 : i32
    %c0_i32_1 = arith.constant 0 : i32
    return %c0_i32, %c0_i32_0 : i32, i32
  }
  func.func @transform_4(%arg0: i32) -> (i32, i32) {
    %c0_i32 = arith.constant 0 : i32
    %c0_i32_0 = arith.constant 0 : i32
    %c0_i32_1 = arith.constant 0 : i32
    return %c0_i32, %c0_i32_0 : i32, i32
  }
  func.func @transform_5(%arg0: i32) -> (i32, i32) {
    %c0_i32 = arith.constant 0 : i32
    %c0_i32_0 = arith.constant 0 : i32
    %c0_i32_1 = arith.constant 0 : i32
    return %c0_i32, %c0_i32_0 : i32, i32
  }
  func.func @transform_6(%arg0: i32) -> (i32, i32) {
    %c0_i32 = arith.constant 0 : i32
    %c0_i32_0 = arith.constant 0 : i32
    %c0_i32_1 = arith.constant 0 : i32
    return %c0_i32, %c0_i32_0 : i32, i32
  }
  func.func @transform_7(%arg0: i32) -> (i32, i32) {
    %c0_i32 = arith.constant 0 : i32
    %c0_i32_0 = arith.constant 0 : i32
    %c0_i32_1 = arith.constant 0 : i32
    return %c0_i32, %c0_i32_0 : i32, i32
  }
  func.func @transform_8(%arg0: i32) -> (i32, i32) {
    %c0_i32 = arith.constant 0 : i32
    %c0_i32_0 = arith.constant 0 : i32
    %c0_i32_1 = arith.constant 0 : i32
    return %c0_i32, %c0_i32_0 : i32, i32
  }
  func.func @transform_9(%arg0: i32) -> (i32, i32) {
    %c0_i32 = arith.constant 0 : i32
    %c0_i32_0 = arith.constant 0 : i32
    return %arg0, %c0_i32 : i32, i32
  }
}

</mosaic_0001>

<llo_original>
// kernel: tpu_custom_call.1
$region0: #{tpu_custom_call.1}
  #allocation0 [shape = 'u32[]', space=smem, size = 0x4, offset = 0x4, fixed_abs, tag = 'smem constant byte address 0x4 - core index']
  #allocation1 [shape = 'u32[144,128]{1,0:T(1,128)}', space=vmem, size = 0x12000, scoped, tag = 'internal scratch']
  %s0 = inlined_call_operand.hbm [shape: f32[8,8,16], index: 0, kind: input, shape index: {}]
  %s1 = inlined_call_operand.hbm [shape: f32[16,32], index: 1, kind: input, shape index: {}]
  %s2 = inlined_call_operand.vmem [shape: f32[1,32], index: 2, kind: input, shape index: {}]
  %s3 = inlined_call_operand.vmem [shape: f32[32,32], index: 3, kind: input, shape index: {}]
  %s4 = inlined_call_operand.vmem [shape: f32[1,32], index: 4, kind: input, shape index: {}]
  %s5 = inlined_call_operand.hbm [shape: f32[32,32], index: 5, kind: input, shape index: {}]
  %s6 = inlined_call_operand.vmem [shape: f32[1,32], index: 6, kind: input, shape index: {}]
  %s7 = inlined_call_operand.vmem [shape: f32[32,8], index: 7, kind: input, shape index: {}]
  %s8 = inlined_call_operand.vmem [shape: f32[1,8], index: 8, kind: input, shape index: {}]
  %s9 = inlined_call_operand.hbm [shape: f32[8,8], index: 9, kind: output, shape index: {}]
  %s10 = sld [smem:[#allocation0]]
  $region58: #{tpu_custom_call.1} parent=0
    _
  %s12 = ssub.s32 1, %s10
  %s13 = scalar_select 0, %s12, %s10
  $region1: #{tpu_custom_call.1} parent=0
    #allocation2 [shape = 'u8[32768]{0}', space=vmem, size = 0x8000, scoped, tag = 'input window, operand 0, single buffered']
    #allocation3 [shape = 's32[1]{0}', space=sflag, size = 0x4, scoped, tag = 'scoped memory for tpu_custom_call.1']
    #allocation4 [shape = 's32[1]{0}', space=sflag, size = 0x4, scoped, tag = 'scoped memory for tpu_custom_call.1']
    #allocation5 [shape = 'u8[8192]{0}', space=vmem, size = 0x2000, scoped, tag = 'input window, operand 1, single buffered']
    #allocation6 [shape = 's32[1]{0}', space=sflag, size = 0x4, scoped, tag = 'scoped memory for tpu_custom_call.1']
    #allocation7 [shape = 'u8[16384]{0}', space=vmem, size = 0x4000, scoped, tag = 'input window, operand 5, single buffered']
    #allocation8 [shape = 'u8[4096]{0}', space=vmem, size = 0x1000, scoped, tag = 'output window, operand 0, single buffered']
    %14 = vsyncpa [#allocation3], 0
    %15 = vsyncpa [#allocation6], 0
    %16 = vsyncpa [#allocation4], 0
    // Predicated region
    $region2: #{tpu_custom_call.1} parent=1 // pred_check
      _
    $region3: #{tpu_custom_call.1} parent=1 // pred_check_branch
      %18 = sbr.rel (0) target = $region5
    $region4: #{tpu_custom_call.1} parent=1 // pred_region
      %s20 = ssub.s32 1024, 1024
      %21 = vsyncadd [#allocation3], %s20
      %s22 = sshll.u32 [#allocation2], 4
      %s23 = int_to_ptr.vmem [resolvable:$true] %s22
      %28 = dma.hbm_to_vmem [thread:$0]  %s0, 1024, %s23, [#allocation3], 128, 128, 8
    $region5: #{tpu_custom_call.1} parent=1 // pred_fallthru
      _
    // Predicated region
    $region6: #{tpu_custom_call.1} parent=1 // pred_check
      _
    $region7: #{tpu_custom_call.1} parent=1 // pred_check_branch
      %30 = sbr.rel (0) target = $region9
    $region8: #{tpu_custom_call.1} parent=1 // pred_region
      %s32 = ssub.s32 256, 256
      %33 = vsyncadd [#allocation6], %s32
      %s34 = sshll.u32 [#allocation5], 4
      %s35 = int_to_ptr.vmem [resolvable:$true] %s34
      %40 = dma.hbm_to_vmem [thread:$0]  %s1, 256, %s35, [#allocation6], 128, 128, 8
    $region9: #{tpu_custom_call.1} parent=1 // pred_fallthru
      _
    // Predicated region
    $region10: #{tpu_custom_call.1} parent=1 // pred_check
      _
    $region11: #{tpu_custom_call.1} parent=1 // pred_check_branch
      %42 = sbr.rel (0) target = $region13
    $region12: #{tpu_custom_call.1} parent=1 // pred_region
      _
    $region13: #{tpu_custom_call.1} parent=1 // pred_fallthru
      _
    // Predicated region
    $region14: #{tpu_custom_call.1} parent=1 // pred_check
      _
    $region15: #{tpu_custom_call.1} parent=1 // pred_check_branch
      %44 = sbr.rel (0) target = $region17
    $region16: #{tpu_custom_call.1} parent=1 // pred_region
      _
    $region17: #{tpu_custom_call.1} parent=1 // pred_fallthru
      _
    // Predicated region
    $region18: #{tpu_custom_call.1} parent=1 // pred_check
      _
    $region19: #{tpu_custom_call.1} parent=1 // pred_check_branch
      %46 = sbr.rel (0) target = $region21
    $region20: #{tpu_custom_call.1} parent=1 // pred_region
      _
    $region21: #{tpu_custom_call.1} parent=1 // pred_fallthru
      _
    // Predicated region
    $region22: #{tpu_custom_call.1} parent=1 // pred_check
      _
    $region23: #{tpu_custom_call.1} parent=1 // pred_check_branch
      %48 = sbr.rel (0) target = $region25
    $region24: #{tpu_custom_call.1} parent=1 // pred_region
      %s50 = ssub.s32 512, 512
      %51 = vsyncadd [#allocation6], %s50
      %s52 = sshll.u32 [#allocation7], 4
      %s53 = int_to_ptr.vmem [resolvable:$true] %s52
      %58 = dma.hbm_to_vmem [thread:$0]  %s5, 512, %s53, [#allocation6], 128, 128, 8
    $region25: #{tpu_custom_call.1} parent=1 // pred_fallthru
      _
    // Predicated region
    $region26: #{tpu_custom_call.1} parent=1 // pred_check
      _
    $region27: #{tpu_custom_call.1} parent=1 // pred_check_branch
      %60 = sbr.rel (0) target = $region29
    $region28: #{tpu_custom_call.1} parent=1 // pred_region
      _
    $region29: #{tpu_custom_call.1} parent=1 // pred_fallthru
      _
    // Predicated region
    $region30: #{tpu_custom_call.1} parent=1 // pred_check
      _
    $region31: #{tpu_custom_call.1} parent=1 // pred_check_branch
      %62 = sbr.rel (0) target = $region33
    $region32: #{tpu_custom_call.1} parent=1 // pred_region
      _
    $region33: #{tpu_custom_call.1} parent=1 // pred_fallthru
      _
    // Predicated region
    $region34: #{tpu_custom_call.1} parent=1 // pred_check
      _
    $region35: #{tpu_custom_call.1} parent=1 // pred_check_branch
      %64 = sbr.rel (0) target = $region37
    $region36: #{tpu_custom_call.1} parent=1 // pred_region
      _
    $region37: #{tpu_custom_call.1} parent=1 // pred_fallthru
      _
    // Predicated region
    $region38: #{tpu_custom_call.1} parent=1 // pred_check
      _
    $region39: #{tpu_custom_call.1} parent=1 // pred_check_branch
      %66 = sbr.rel (0) target = $region41
    $region40: #{tpu_custom_call.1} parent=1 // pred_region
      %67 = dma.done [#allocation3], 1024
    $region41: #{tpu_custom_call.1} parent=1 // pred_fallthru
      _
    // Predicated region
    $region42: #{tpu_custom_call.1} parent=1 // pred_check
      _
    $region43: #{tpu_custom_call.1} parent=1 // pred_check_branch
      %69 = sbr.rel (0) target = $region45
    $region44: #{tpu_custom_call.1} parent=1 // pred_region
      %70 = dma.done [#allocation6], 256
    $region45: #{tpu_custom_call.1} parent=1 // pred_fallthru
      _
    // Predicated region
    $region46: #{tpu_custom_call.1} parent=1 // pred_check
      _
    $region47: #{tpu_custom_call.1} parent=1 // pred_check_branch
      %72 = sbr.rel (0) target = $region49
    $region48: #{tpu_custom_call.1} parent=1 // pred_region
      %73 = dma.done [#allocation6], 512
    $region49: #{tpu_custom_call.1} parent=1 // pred_fallthru
      _
    %v74 = vld [vmem:[#allocation2] sm:$0xff]
    %v75 = vld [vmem:[#allocation2 + $0x8] sm:$0xff]
    %v76 = vld [vmem:[#allocation2 + $0x10] sm:$0xff]
    %v77 = vld [vmem:[#allocation2 + $0x18] sm:$0xff]
    %v78 = vld [vmem:[#allocation2 + $0x20] sm:$0xff]
    %v79 = vld [vmem:[#allocation2 + $0x28] sm:$0xff]
    %v80 = vld [vmem:[#allocation2 + $0x30] sm:$0xff]
    %v81 = vld [vmem:[#allocation2 + $0x38] sm:$0xff]
    %v82 = vld [vmem:[#allocation5] sm:$0xff]
    %v83 = vld [vmem:[#allocation5 + $0x8] sm:$0xff]
    %v84 = vld [vmem:[%s2] sm:$0x1]
    %v86 = vlaneseq
    %v87 = vshrl.u32 %v86, 7
    %v88 = vsub.s32 0, %v87
    %v89 = vrot.slane %v84, %v88
    %vm91 = vcmask 130048
    %v93 = vsel %vm91, %v74, 0
    %v96 = vsel %vm91, %v75, 0
    %v99 = vsel %vm91, %v76, 0
    %v102 = vsel %vm91, %v77, 0
    %v105 = vsel %vm91, %v78, 0
    %v108 = vsel %vm91, %v79, 0
    %v111 = vsel %vm91, %v80, 0
    %v114 = vsel %vm91, %v81, 0
    %116 = vmatprep.subr.mxu0 0.0
    %117 = vmatpush1.msra.mxu0 0.0
    %118 = vmatprep.subr.mxu0 0.0
    %119 = vmatpush1.msra.mxu0 0.0
    %120 = vmatprep.subr.mxu0 0.0
    %121 = vmatpush1.msra.mxu0 0.0
    %122 = vmatprep.subr.mxu0 0.0
    %123 = vmatpush1.msra.mxu0 0.0
    %124 = vmatprep.subr.mxu0 0.0
    %125 = vmatpush1.msra.mxu0 0.0
    %126 = vmatprep.subr.mxu0 0.0
    %127 = vmatpush1.msra.mxu0 0.0
    %128 = vmatprep.subr.mxu0 0.0
    %129 = vmatpush1.msra.mxu0 0.0
    %130 = vmatprep.subr.mxu0 0.0
    %131 = vmatpush1.msra.mxu0 0.0
    %132 = vmatprep.subr.mxu0 0.0
    %133 = vmatpush1.msra.mxu0 0.0
    %134 = vmatprep.subr.mxu0 0.0
    %135 = vmatpush1.msra.mxu0 0.0
    %136 = vmatprep.subr.mxu0 0.0
    %137 = vmatpush1.msra.mxu0 0.0
    %138 = vmatprep.subr.mxu0 0.0
    %139 = vmatpush1.msra.mxu0 0.0
    %140 = vmatprep.subr.mxu0 0.0
    %141 = vmatpush1.msra.mxu0 0.0
    %142 = vmatprep.subr.mxu0 0.0
    %143 = vmatpush1.msra.mxu0 0.0
    %144 = vmatprep.subr.mxu0 0.0
    %145 = vmatpush1.msra.mxu0 %v83
    %146 = vmatprep.subr.mxu0 0.0
    %147 = vmatpush1.msra.mxu0 %v82
    %148 = vmatprep.subr.mxu0 0.0
    %149 = vmatpush2.msra.mxu0 0.0
    %150 = vmatprep.subr.mxu0 0.0
    %151 = vmatpush2.msra.mxu0 0.0
    %152 = vmatprep.subr.mxu0 0.0
    %153 = vmatpush2.msra.mxu0 0.0
    %154 = vmatprep.subr.mxu0 0.0
    %155 = vmatpush2.msra.mxu0 0.0
    %156 = vmatprep.subr.mxu0 0.0
    %157 = vmatpush2.msra.mxu0 0.0
    %158 = vmatprep.subr.mxu0 0.0
    %159 = vmatpush2.msra.mxu0 0.0
    %160 = vmatprep.subr.mxu0 0.0
    %161 = vmatpush2.msra.mxu0 0.0
    %162 = vmatprep.subr.mxu0 0.0
    %163 = vmatpush2.msra.mxu0 0.0
    %164 = vmatprep.subr.mxu0 0.0
    %165 = vmatpush2.msra.mxu0 0.0
    %166 = vmatprep.subr.mxu0 0.0
    %167 = vmatpush2.msra.mxu0 0.0
    %168 = vmatprep.subr.mxu0 0.0
    %169 = vmatpush2.msra.mxu0 0.0
    %170 = vmatprep.subr.mxu0 0.0
    %171 = vmatpush2.msra.mxu0 0.0
    %172 = vmatprep.subr.mxu0 0.0
    %173 = vmatpush2.msra.mxu0 0.0
    %174 = vmatprep.subr.mxu0 0.0
    %175 = vmatpush2.msra.mxu0 0.0
    %176 = vmatprep.subr.mxu0 0.0
    %177 = vmatpush2.msra.mxu0 0.0
    %178 = vmatprep.subr.mxu0 0.0
    %179 = vmatpush2.msra.mxu0 0.0
    %180 = vmatprep.mubr.f32.mxu0 0.0
    %181 = vmatmul.mubr.f32.gmra.mxu0 %v93
    %v182 = vpop.f32.mrf.mxu0
    %v183 = vadd.f32 %v89, %v182
    %v184 = vpop.f32.mrf.mxu0
    %185 = vmatprep.mubr.f32.mxu0 0.0
    %186 = vmatmul.mubr.f32.gmra.mxu0 %v96
    %v187 = vpop.f32.mrf.mxu0
    %v188 = vadd.f32 %v89, %v187
    %v189 = vpop.f32.mrf.mxu0
    %190 = vmatprep.mubr.f32.mxu0 0.0
    %191 = vmatmul.mubr.f32.gmra.mxu0 %v99
    %v192 = vpop.f32.mrf.mxu0
    %v193 = vadd.f32 %v89, %v192
    %v194 = vpop.f32.mrf.mxu0
    %195 = vmatprep.mubr.f32.mxu0 0.0
    %196 = vmatmul.mubr.f32.gmra.mxu0 %v102
    %v197 = vpop.f32.mrf.mxu0
    %v198 = vadd.f32 %v89, %v197
    %v199 = vpop.f32.mrf.mxu0
    %200 = vmatprep.mubr.f32.mxu0 0.0
    %201 = vmatmul.mubr.f32.gmra.mxu0 %v105
    %v202 = vpop.f32.mrf.mxu0
    %v203 = vadd.f32 %v89, %v202
    %v204 = vpop.f32.mrf.mxu0
    %205 = vmatprep.mubr.f32.mxu0 0.0
    %206 = vmatmul.mubr.f32.gmra.mxu0 %v108
    %v207 = vpop.f32.mrf.mxu0
    %v208 = vadd.f32 %v89, %v207
    %v209 = vpop.f32.mrf.mxu0
    %210 = vmatprep.mubr.f32.mxu0 0.0
    %211 = vmatmul.mubr.f32.gmra.mxu0 %v111
    %v212 = vpop.f32.mrf.mxu0
    %v213 = vadd.f32 %v89, %v212
    %v214 = vpop.f32.mrf.mxu0
    %215 = vmatprep.mubr.f32.mxu0 0.0
    %216 = vmatmul.mubr.f32.gmra.mxu0 %v114
    %v217 = vpop.f32.mrf.mxu0
    %v218 = vadd.f32 %v89, %v217
    %v219 = vpop.f32.mrf.mxu0
    %220 = vdwg.mxu0
    %v221 = vmax.f32 %v183, 0.0
    %v222 = vmax.f32 %v188, 0.0
    %v223 = vmax.f32 %v193, 0.0
    %v224 = vmax.f32 %v198, 0.0
    %v225 = vmax.f32 %v203, 0.0
    %v226 = vmax.f32 %v208, 0.0
    %v227 = vmax.f32 %v213, 0.0
    %v228 = vmax.f32 %v218, 0.0
    %vm229 = vcmask 261120
    %v230 = vsel %vm229, %v221, 0.0
    %v231 = vrot.slane %v230, 4
    %v232 = vadd.f32 %v230, %v231
    %v233 = vrot.slane %v232, 2
    %v234 = vadd.f32 %v232, %v233
    %v235 = vrot.slane %v234, 1
    %v236 = vadd.f32 %v234, %v235
    %v237 = vsel %vm229, %v222, 0.0
    %v238 = vrot.slane %v237, 4
    %v239 = vadd.f32 %v237, %v238
    %v240 = vrot.slane %v239, 2
    %v241 = vadd.f32 %v239, %v240
    %v242 = vrot.slane %v241, 1
    %v243 = vadd.f32 %v241, %v242
    %v244 = vsel %vm229, %v223, 0.0
    %v245 = vrot.slane %v244, 4
    %v246 = vadd.f32 %v244, %v245
    %v247 = vrot.slane %v246, 2
    %v248 = vadd.f32 %v246, %v247
    %v249 = vrot.slane %v248, 1
    %v250 = vadd.f32 %v248, %v249
    %v251 = vsel %vm229, %v224, 0.0
    %v252 = vrot.slane %v251, 4
    %v253 = vadd.f32 %v251, %v252
    %v254 = vrot.slane %v253, 2
    %v255 = vadd.f32 %v253, %v254
    %v256 = vrot.slane %v255, 1
    %v257 = vadd.f32 %v255, %v256
    %v258 = vsel %vm229, %v225, 0.0
    %v259 = vrot.slane %v258, 4
    %v260 = vadd.f32 %v258, %v259
    %v261 = vrot.slane %v260, 2
    %v262 = vadd.f32 %v260, %v261
    %v263 = vrot.slane %v262, 1
    %v264 = vadd.f32 %v262, %v263
    %v265 = vsel %vm229, %v226, 0.0
    %v266 = vrot.slane %v265, 4
    %v267 = vadd.f32 %v265, %v266
    %v268 = vrot.slane %v267, 2
    %v269 = vadd.f32 %v267, %v268
    %v270 = vrot.slane %v269, 1
    %v271 = vadd.f32 %v269, %v270
    %v272 = vsel %vm229, %v227, 0.0
    %v273 = vrot.slane %v272, 4
    %v274 = vadd.f32 %v272, %v273
    %v275 = vrot.slane %v274, 2
    %v276 = vadd.f32 %v274, %v275
    %v277 = vrot.slane %v276, 1
    %v278 = vadd.f32 %v276, %v277
    %v279 = vsel %vm229, %v228, 0.0
    %v280 = vrot.slane %v279, 4
    %v281 = vadd.f32 %v279, %v280
    %v282 = vrot.slane %v281, 2
    %v283 = vadd.f32 %v281, %v282
    %v284 = vrot.slane %v283, 1
    %v285 = vadd.f32 %v283, %v284
    %v286 = vld [vmem:[%s3] sm:$0xff]
    %v287 = vld [vmem:[%s3 + $0x8] sm:$0xff]
    %v288 = vld [vmem:[%s3 + $0x10] sm:$0xff]
    %v289 = vld [vmem:[%s3 + $0x18] sm:$0xff]
    %v290 = vld [vmem:[%s4] sm:$0x1]
    %v291 = vmul.f32 %v290, 8.0
    %v293 = vlaneseq
    %v294 = vshrl.u32 %v293, 7
    %v295 = vsub.s32 0, %v294
    %v296 = vrot.slane %v291, %v295
    %vm306 = vcmask 1041409
    %v307 = vsel %vm306, %v243, %v236
    %vm308 = vcmask 1042434
    %v309 = vsel %vm308, %v250, %v307
    %vm310 = vcmask 1043459
    %v311 = vsel %vm310, %v257, %v309
    %vm312 = vcmask 1044484
    %v313 = vsel %vm312, %v264, %v311
    %vm314 = vcmask 1045509
    %v315 = vsel %vm314, %v271, %v313
    %vm316 = vcmask 1046534
    %v317 = vsel %vm316, %v278, %v315
    %vm318 = vcmask 1047559
    %v319 = vsel %vm318, %v285, %v317
    %v320 = vsel %vm229, %v319, 0
    %322 = vmatprep.subr.mxu0 0.0
    %323 = vmatpush1.msra.mxu0 0.0
    %324 = vmatprep.subr.mxu0 0.0
    %325 = vmatpush1.msra.mxu0 0.0
    %326 = vmatprep.subr.mxu0 0.0
    %327 = vmatpush1.msra.mxu0 0.0
    %328 = vmatprep.subr.mxu0 0.0
    %329 = vmatpush1.msra.mxu0 0.0
    %330 = vmatprep.subr.mxu0 0.0
    %331 = vmatpush1.msra.mxu0 0.0
    %332 = vmatprep.subr.mxu0 0.0
    %333 = vmatpush1.msra.mxu0 0.0
    %334 = vmatprep.subr.mxu0 0.0
    %335 = vmatpush1.msra.mxu0 0.0
    %336 = vmatprep.subr.mxu0 0.0
    %337 = vmatpush1.msra.mxu0 0.0
    %338 = vmatprep.subr.mxu0 0.0
    %339 = vmatpush1.msra.mxu0 0.0
    %340 = vmatprep.subr.mxu0 0.0
    %341 = vmatpush1.msra.mxu0 0.0
    %342 = vmatprep.subr.mxu0 0.0
    %343 = vmatpush1.msra.mxu0 0.0
    %344 = vmatprep.subr.mxu0 0.0
    %345 = vmatpush1.msra.mxu0 0.0
    %346 = vmatprep.subr.mxu0 0.0
    %347 = vmatpush1.msra.mxu0 %v289
    %348 = vmatprep.subr.mxu0 0.0
    %349 = vmatpush1.msra.mxu0 %v288
    %350 = vmatprep.subr.mxu0 0.0
    %351 = vmatpush1.msra.mxu0 %v287
    %352 = vmatprep.subr.mxu0 0.0
    %353 = vmatpush1.msra.mxu0 %v286
    %354 = vmatprep.subr.mxu0 0.0
    %355 = vmatpush2.msra.mxu0 0.0
    %356 = vmatprep.subr.mxu0 0.0
    %357 = vmatpush2.msra.mxu0 0.0
    %358 = vmatprep.subr.mxu0 0.0
    %359 = vmatpush2.msra.mxu0 0.0
    %360 = vmatprep.subr.mxu0 0.0
    %361 = vmatpush2.msra.mxu0 0.0
    %362 = vmatprep.subr.mxu0 0.0
    %363 = vmatpush2.msra.mxu0 0.0
    %364 = vmatprep.subr.mxu0 0.0
    %365 = vmatpush2.msra.mxu0 0.0
    %366 = vmatprep.subr.mxu0 0.0
    %367 = vmatpush2.msra.mxu0 0.0
    %368 = vmatprep.subr.mxu0 0.0
    %369 = vmatpush2.msra.mxu0 0.0
    %370 = vmatprep.subr.mxu0 0.0
    %371 = vmatpush2.msra.mxu0 0.0
    %372 = vmatprep.subr.mxu0 0.0
    %373 = vmatpush2.msra.mxu0 0.0
    %374 = vmatprep.subr.mxu0 0.0
    %375 = vmatpush2.msra.mxu0 0.0
    %376 = vmatprep.subr.mxu0 0.0
    %377 = vmatpush2.msra.mxu0 0.0
    %378 = vmatprep.subr.mxu0 0.0
    %379 = vmatpush2.msra.mxu0 0.0
    %380 = vmatprep.subr.mxu0 0.0
    %381 = vmatpush2.msra.mxu0 0.0
    %382 = vmatprep.subr.mxu0 0.0
    %383 = vmatpush2.msra.mxu0 0.0
    %384 = vmatprep.subr.mxu0 0.0
    %385 = vmatpush2.msra.mxu0 0.0
    %386 = vmatprep.mubr.f32.mxu0 0.0
    %387 = vmatmul.mubr.f32.gmra.mxu0 %v320
    %v388 = vpop.f32.mrf.mxu0
    %v389 = vadd.f32 %v296, %v388
    %v390 = vpop.f32.mrf.mxu0
    %391 = vdwg.mxu0
    %v392 = vld [vmem:[#allocation7] sm:$0xff]
    %v393 = vld [vmem:[#allocation7 + $0x8] sm:$0xff]
    %v394 = vld [vmem:[#allocation7 + $0x10] sm:$0xff]
    %v395 = vld [vmem:[#allocation7 + $0x18] sm:$0xff]
    %v396 = vld [vmem:[%s6] sm:$0x1]
    %v398 = vlaneseq
    %v399 = vshrl.u32 %v398, 7
    %v400 = vsub.s32 0, %v399
    %v401 = vrot.slane %v396, %v400
    %v404 = vsel %vm229, %v389, 0
    %406 = vmatprep.subr.mxu0 0.0
    %407 = vmatpush1.msra.mxu0 0.0
    %408 = vmatprep.subr.mxu0 0.0
    %409 = vmatpush1.msra.mxu0 0.0
    %410 = vmatprep.subr.mxu0 0.0
    %411 = vmatpush1.msra.mxu0 0.0
    %412 = vmatprep.subr.mxu0 0.0
    %413 = vmatpush1.msra.mxu0 0.0
    %414 = vmatprep.subr.mxu0 0.0
    %415 = vmatpush1.msra.mxu0 0.0
    %416 = vmatprep.subr.mxu0 0.0
    %417 = vmatpush1.msra.mxu0 0.0
    %418 = vmatprep.subr.mxu0 0.0
    %419 = vmatpush1.msra.mxu0 0.0
    %420 = vmatprep.subr.mxu0 0.0
    %421 = vmatpush1.msra.mxu0 0.0
    %422 = vmatprep.subr.mxu0 0.0
    %423 = vmatpush1.msra.mxu0 0.0
    %424 = vmatprep.subr.mxu0 0.0
    %425 = vmatpush1.msra.mxu0 0.0
    %426 = vmatprep.subr.mxu0 0.0
    %427 = vmatpush1.msra.mxu0 0.0
    %428 = vmatprep.subr.mxu0 0.0
    %429 = vmatpush1.msra.mxu0 0.0
    %430 = vmatprep.subr.mxu0 0.0
    %431 = vmatpush1.msra.mxu0 %v395
    %432 = vmatprep.subr.mxu0 0.0
    %433 = vmatpush1.msra.mxu0 %v394
    %434 = vmatprep.subr.mxu0 0.0
    %435 = vmatpush1.msra.mxu0 %v393
    %436 = vmatprep.subr.mxu0 0.0
    %437 = vmatpush1.msra.mxu0 %v392
    %438 = vmatprep.subr.mxu0 0.0
    %439 = vmatpush2.msra.mxu0 0.0
    %440 = vmatprep.subr.mxu0 0.0
    %441 = vmatpush2.msra.mxu0 0.0
    %442 = vmatprep.subr.mxu0 0.0
    %443 = vmatpush2.msra.mxu0 0.0
    %444 = vmatprep.subr.mxu0 0.0
    %445 = vmatpush2.msra.mxu0 0.0
    %446 = vmatprep.subr.mxu0 0.0
    %447 = vmatpush2.msra.mxu0 0.0
    %448 = vmatprep.subr.mxu0 0.0
    %449 = vmatpush2.msra.mxu0 0.0
    %450 = vmatprep.subr.mxu0 0.0
    %451 = vmatpush2.msra.mxu0 0.0
    %452 = vmatprep.subr.mxu0 0.0
    %453 = vmatpush2.msra.mxu0 0.0
    %454 = vmatprep.subr.mxu0 0.0
    %455 = vmatpush2.msra.mxu0 0.0
    %456 = vmatprep.subr.mxu0 0.0
    %457 = vmatpush2.msra.mxu0 0.0
    %458 = vmatprep.subr.mxu0 0.0
    %459 = vmatpush2.msra.mxu0 0.0
    %460 = vmatprep.subr.mxu0 0.0
    %461 = vmatpush2.msra.mxu0 0.0
    %462 = vmatprep.subr.mxu0 0.0
    %463 = vmatpush2.msra.mxu0 0.0
    %464 = vmatprep.subr.mxu0 0.0
    %465 = vmatpush2.msra.mxu0 0.0
    %466 = vmatprep.subr.mxu0 0.0
    %467 = vmatpush2.msra.mxu0 0.0
    %468 = vmatprep.subr.mxu0 0.0
    %469 = vmatpush2.msra.mxu0 0.0
    %470 = vmatprep.mubr.f32.mxu0 0.0
    %471 = vmatmul.mubr.f32.gmra.mxu0 %v404
    %v472 = vpop.f32.mrf.mxu0
    %v473 = vadd.f32 %v401, %v472
    %v474 = vpop.f32.mrf.mxu0
    %475 = vdwg.mxu0
    %v476 = vmax.f32 %v473, 0.0
    %v477 = vld [vmem:[%s7] sm:$0xff]
    %v478 = vld [vmem:[%s7 + $0x8] sm:$0xff]
    %v479 = vld [vmem:[%s7 + $0x10] sm:$0xff]
    %v480 = vld [vmem:[%s7 + $0x18] sm:$0xff]
    %v481 = vld [vmem:[%s8] sm:$0x1]
    %v483 = vlaneseq
    %v484 = vshrl.u32 %v483, 7
    %v485 = vsub.s32 0, %v484
    %v486 = vrot.slane %v481, %v485
    %v489 = vsel %vm229, %v476, 0
    %491 = vmatprep.subr.mxu0 0.0
    %492 = vmatpush1.msra.mxu0 0.0
    %493 = vmatprep.subr.mxu0 0.0
    %494 = vmatpush1.msra.mxu0 0.0
    %495 = vmatprep.subr.mxu0 0.0
    %496 = vmatpush1.msra.mxu0 0.0
    %497 = vmatprep.subr.mxu0 0.0
    %498 = vmatpush1.msra.mxu0 0.0
    %499 = vmatprep.subr.mxu0 0.0
    %500 = vmatpush1.msra.mxu0 0.0
    %501 = vmatprep.subr.mxu0 0.0
    %502 = vmatpush1.msra.mxu0 0.0
    %503 = vmatprep.subr.mxu0 0.0
    %504 = vmatpush1.msra.mxu0 0.0
    %505 = vmatprep.subr.mxu0 0.0
    %506 = vmatpush1.msra.mxu0 0.0
    %507 = vmatprep.subr.mxu0 0.0
    %508 = vmatpush1.msra.mxu0 0.0
    %509 = vmatprep.subr.mxu0 0.0
    %510 = vmatpush1.msra.mxu0 0.0
    %511 = vmatprep.subr.mxu0 0.0
    %512 = vmatpush1.msra.mxu0 0.0
    %513 = vmatprep.subr.mxu0 0.0
    %514 = vmatpush1.msra.mxu0 0.0
    %515 = vmatprep.subr.mxu0 0.0
    %516 = vmatpush1.msra.mxu0 %v480
    %517 = vmatprep.subr.mxu0 0.0
    %518 = vmatpush1.msra.mxu0 %v479
    %519 = vmatprep.subr.mxu0 0.0
    %520 = vmatpush1.msra.mxu0 %v478
    %521 = vmatprep.subr.mxu0 0.0
    %522 = vmatpush1.msra.mxu0 %v477
    %523 = vmatprep.subr.mxu0 0.0
    %524 = vmatpush2.msra.mxu0 0.0
    %525 = vmatprep.subr.mxu0 0.0
    %526 = vmatpush2.msra.mxu0 0.0
    %527 = vmatprep.subr.mxu0 0.0
    %528 = vmatpush2.msra.mxu0 0.0
    %529 = vmatprep.subr.mxu0 0.0
    %530 = vmatpush2.msra.mxu0 0.0
    %531 = vmatprep.subr.mxu0 0.0
    %532 = vmatpush2.msra.mxu0 0.0
    %533 = vmatprep.subr.mxu0 0.0
    %534 = vmatpush2.msra.mxu0 0.0
    %535 = vmatprep.subr.mxu0 0.0
    %536 = vmatpush2.msra.mxu0 0.0
    %537 = vmatprep.subr.mxu0 0.0
    %538 = vmatpush2.msra.mxu0 0.0
    %539 = vmatprep.subr.mxu0 0.0
    %540 = vmatpush2.msra.mxu0 0.0
    %541 = vmatprep.subr.mxu0 0.0
    %542 = vmatpush2.msra.mxu0 0.0
    %543 = vmatprep.subr.mxu0 0.0
    %544 = vmatpush2.msra.mxu0 0.0
    %545 = vmatprep.subr.mxu0 0.0
    %546 = vmatpush2.msra.mxu0 0.0
    %547 = vmatprep.subr.mxu0 0.0
    %548 = vmatpush2.msra.mxu0 0.0
    %549 = vmatprep.subr.mxu0 0.0
    %550 = vmatpush2.msra.mxu0 0.0
    %551 = vmatprep.subr.mxu0 0.0
    %552 = vmatpush2.msra.mxu0 0.0
    %553 = vmatprep.subr.mxu0 0.0
    %554 = vmatpush2.msra.mxu0 0.0
    %555 = vmatprep.mubr.f32.mxu0 0.0
    %556 = vmatmul.mubr.f32.gmra.mxu0 %v489
    %v557 = vpop.f32.mrf.mxu0
    %v558 = vadd.f32 %v486, %v557
    %v559 = vpop.f32.mrf.mxu0
    %560 = vdwg.mxu0
    %vm561 = vcmask 64512
    %562 = vst.msk [vmem:[#allocation8] sm:$0xff] %vm561, %v558
    // Predicated region
    $region50: #{tpu_custom_call.1} parent=1 // pred_check
      _
    $region51: #{tpu_custom_call.1} parent=1 // pred_check_branch
      %564 = sbr.rel (0) target = $region53
    $region52: #{tpu_custom_call.1} parent=1 // pred_region
      %s566 = ssub.s32 128, 128
      %567 = vsyncadd [#allocation4], %s566
      %s569 = sshll.u32 [#allocation8], 4
      %s570 = int_to_ptr.vmem [resolvable:$true] %s569
      %572 = dma.vmem_to_hbm [thread:$0]  %s570, 128, %s9, [#allocation4]
    $region53: #{tpu_custom_call.1} parent=1 // pred_fallthru
      _
    // Predicated region
    $region54: #{tpu_custom_call.1} parent=1 // pred_check
      _
    $region55: #{tpu_custom_call.1} parent=1 // pred_check_branch
      %574 = sbr.rel (0) target = $region57
    $region56: #{tpu_custom_call.1} parent=1 // pred_region
      %575 = dma.done [#allocation4], 128
    $region57: #{tpu_custom_call.1} parent=1 // pred_fallthru
      _
    %576 = vsyncpa [#allocation3], 1
    %577 = vsyncpa [#allocation6], 1
    %578 = vsyncpa [#allocation4], 1

</llo_original>
